<compile_context>
chip_gen: v6e
topology: v6e:2x2x1
jax: 0.10.0
libtpu: 0.0.40
codegen_flags: <defaults>
</compile_context>

<pallas_src>
import functools

import numpy as np
import jax
import jax.numpy as jnp
from jax import lax
from jax.experimental import pallas as pl
from jax.experimental.pallas import tpu as pltpu


# ----------------------------------------------------------------------------------
# Host-side (one-time) precompute: fused band weight + packed per-channel vectors
# ----------------------------------------------------------------------------------
def _build_band_weight(w3_hwio, w1_io, wa, wb, W):
    """Fused band matrix (3*W*Cin, 2*W*Cout) with WNAdd scales folded in.

    Columns [0, W*Cout)        : 3x3 conv (all 9 taps; W zero-padding by omission), scaled by wb.
    Columns [W*Cout, 2*W*Cout) : 1x1 shortcut conv (rides on the center dy=1 rows), scaled by wa.
    Row blocks k*W*Cin..(k+1)*W*Cin correspond to x(h-1), x(h), x(h+1) — the x_cat layout.
    (Plain numpy: one-time host precompute, not jit-traced.)
    """
    w3 = np.asarray(w3_hwio, dtype=np.float32)                  # (3, 3, Cin, Cout)
    w1 = np.asarray(w1_io, dtype=np.float32)                    # (Cin, Cout)
    wa = np.asarray(wa, dtype=np.float32)                       # (Cout,)
    wb = np.asarray(wb, dtype=np.float32)                       # (Cout,)
    Cin, Cout = w3.shape[2], w3.shape[3]
    w3s = w3 * wb[None, None, None, :]     # fold WNAdd residue scale (wb >= 0 -> PReLU-safe)
    w1s = w1 * wa[None, :]                 # fold WNAdd shortcut scale
    band = np.zeros((3, W * Cin, 2 * W * Cout), np.float32)
    for dy in range(3):
        for dx in range(3):
            for w in range(W):
                win = w + dx - 1           # input column feeding output column w
                if 0 <= win < W:
                    band[dy,
                         win * Cin:(win + 1) * Cin,
                         w * Cout:(w + 1) * Cout] = w3s[dy, dx]
    for w in range(W):
        band[1,
             w * Cin:(w + 1) * Cin,
             W * Cout + w * Cout: W * Cout + (w + 1) * Cout] = w1s
    return jnp.asarray(band.reshape(3 * W * Cin, 2 * W * Cout))


def _pack_channel_vectors(b3, alpha, b1, wa, wb, W):
    """Pack per-channel vectors into one (8, W*Cout) tile: rows = [wb*b3, alpha, wa*b1]."""
    b3 = np.asarray(b3, np.float32)
    alpha = np.asarray(alpha, np.float32)
    b1 = np.asarray(b1, np.float32)
    wa = np.asarray(wa, np.float32)
    wb = np.asarray(wb, np.float32)
    Cout = b3.shape[0]
    vec = np.zeros((8, W * Cout), np.float32)
    vec[0] = np.tile(wb * b3, W)       # residue bias, pre-scaled by wb
    vec[1] = np.tile(alpha, W)         # PReLU slope
    vec[2] = np.tile(wa * b1, W)       # shortcut bias, pre-scaled by wa
    return jnp.asarray(vec)


# ----------------------------------------------------------------------------------
# Kernel
# ----------------------------------------------------------------------------------
def mini_res_block_kernel(x_ref, wband_ref, vec_ref, o_ref, xcat_ref, *, H, WCi):
    # x_ref:    (M, W*Cin)          M = B_TILE*H rows of lane-dense activations (B_TILE images)
    # wband_ref:(3*W*Cin, 2*W*Cout) fused conv(3x3)+shortcut(1x1) band, WNAdd scales folded in
    # vec_ref:  (8, W*Cout)         packed per-channel vectors [wb*b3, alpha, wa*b1]
    # o_ref:    (M, W*Cout)         lane-dense output (128 lanes -> unmasked stores)
    # xcat_ref: (M, 3*W*Cin)        VMEM scratch holding the tap-concatenated operand (K=192)
    M, WCo = o_ref.shape

    x = x_ref[...]                                                   # (M, WCi)
    row_in_img = lax.broadcasted_iota(jnp.int32, x.shape, 0) % H
    # H-halo handled in-kernel: x_dn[m] = x[m-1] (zero at each image's top row),
    #                           x_up[m] = x[m+1] (zero at each image's bottom row).
    # The (row % H) masks stop the roll from bleeding across batch-image boundaries.
    x_dn = jnp.where(row_in_img != 0, pltpu.roll(x, shift=1, axis=0), 0.0)
    x_up = jnp.where(row_in_img != H - 1, pltpu.roll(x, shift=M - 1, axis=0), 0.0)

    # Single K = 3*W*Cin MXU pass instead of three K = W*Cin passes.
    xcat_ref[:, :WCi] = x_dn
    xcat_ref[:, WCi:2 * WCi] = x
    xcat_ref[:, 2 * WCi:] = x_up
    acc = jnp.dot(xcat_ref[...], wband_ref[...], preferred_element_type=jnp.float32)

    b3t = vec_ref[0:1, :]        # wb * b3
    alphat = vec_ref[1:2, :]     # PReLU slope
    b1t = vec_ref[2:3, :]        # wa * b1

    res_pre = acc[:, :WCo] + b3t                                   # = wb*(conv3x3(x) + b3)
    residue = jnp.where(res_pre > 0, res_pre, alphat * res_pre)    # = wb*PReLU(conv3x3(x)+b3)
    o_ref[...] = (acc[:, WCo:] + b1t + residue).astype(o_ref.dtype)


# ----------------------------------------------------------------------------------
# Wrapper
# ----------------------------------------------------------------------------------
def _pallas_forward(x2d, wband, vec, *, grid_n, b_tile, H, WCi, WCo, out_dtype,
                    single_buffer_consts):
    M = b_tile * H
    const_kw = dict(pipeline_mode=pl.Buffered(1)) if single_buffer_consts else {}
    in_specs = [
        pl.BlockSpec((M, WCi), lambda n: (n, 0)),                       # activations
        pl.BlockSpec(wband.shape, lambda n: (0, 0), **const_kw),        # fused band weights
        pl.BlockSpec(vec.shape, lambda n: (0, 0), **const_kw),          # packed vectors
    ]
    out_spec = pl.BlockSpec((M, WCo), lambda n: (n, 0))
    kernel = functools.partial(mini_res_block_kernel, H=H, WCi=WCi)
    return pl.pallas_call(
        kernel,
        out_shape=jax.ShapeDtypeStruct((grid_n * M, WCo), out_dtype),
        grid_spec=pltpu.PrefetchScalarGridSpec(
            num_scalar_prefetch=0,
            grid=(grid_n,),
            in_specs=in_specs,
            out_specs=out_spec,
            scratch_shapes=[pltpu.VMEM((M, 3 * WCi), jnp.float32)],
        ),
        compiler_params=pltpu.CompilerParams(dimension_semantics=("parallel",)),
    )(x2d, wband, vec)


def mini_res_block(x_nhwc, w3_hwio, b3, alpha, w1_io, b1, wa, wb):
    N, H, W, Cin = x_nhwc.shape
    Cout = w3_hwio.shape[-1]
    WCi, WCo = W * Cin, W * Cout

    # Fold batch into the matmul M dimension, keeping >= 2 grid steps so a v7x chip's two
    # TensorCores both get work ("parallel" grid axis).  b_tile grows with N to fill the MXU.
    b_tile = max(1, pl.cdiv(N, 2))
    grid_n = pl.cdiv(N, b_tile)
    n_pad = grid_n * b_tile

    x2d = x_nhwc.reshape(N * H, WCi)                  # lane-dense activation slab
    if n_pad > N:
        x2d = jnp.pad(x2d, ((0, (n_pad - N) * H), (0, 0)))

    wband = _build_band_weight(w3_hwio, w1_io, wa, wb, W)    # (3*W*Cin, 2*W*Cout)
    vec = _pack_channel_vectors(b3, alpha, b1, wa, wb, W)    # (8, W*Cout)
    # NOTE: wband grows as O(W^2 * Cin * Cout); for scaled-up shapes re-check the VMEM budget
    # (64 MiB on v7x) and either raise vmem_limit_bytes or tile the band's output-column axis.

    kwargs = dict(grid_n=grid_n, b_tile=b_tile, H=H, WCi=WCi, WCo=WCo,
                  out_dtype=x_nhwc.dtype)
    try:
        # Constant-index inputs single-buffered (drops the redundant second VMEM copy of band).
        out2d = jax.block_until_ready(
            _pallas_forward(x2d, wband, vec, single_buffer_consts=True, **kwargs))
    except Exception:
        # JAX build without BlockSpec.pipeline_mode support: fall back to default buffering.
        out2d = _pallas_forward(x2d, wband, vec, single_buffer_consts=False, **kwargs)

    return out2d[:N * H].reshape(N, H, W, Cout)       # back to NHWC


# ----------------------------------------------------------------------------------
# Pure-JAX NCHW reference matching the PyTorch forward
# ----------------------------------------------------------------------------------
def ref_forward_nchw(x, w3_oihw, b3, alpha, w1_oihw, b1, wa, wb):
    y = lax.conv_general_dilated(x, w3_oihw, (1, 1), [(1, 1), (1, 1)],
                                 dimension_numbers=('NCHW', 'OIHW', 'NCHW'),
                                 precision=lax.Precision.HIGHEST)
    y = y + b3[None, :, None, None]
    residue = jnp.where(y > 0, y, alpha[None, :, None, None] * y)
    sc = lax.conv_general_dilated(x, w1_oihw, (1, 1), [(0, 0), (0, 0)],
                                  dimension_numbers=('NCHW', 'OIHW', 'NCHW'),
                                  precision=lax.Precision.HIGHEST)
    sc = sc + b1[None, :, None, None]
    return wa[None, :, None, None] * sc + wb[None, :, None, None] * residue


if __name__ == "__main__":
    N, Cin, Cout, H, W = 2, 4, 8, 16, 16
    residue_ratio = 0.5        # MiniResBlock(4, 8, stride=1, extra_padding=0, residue_ratio=0.5)

    key = jax.random.PRNGKey(0)
    ks = jax.random.split(key, 7)
    x_nchw = jax.random.normal(ks[0], (N, Cin, H, W), jnp.float32)

    # --- WNConv2d(Cin, Cout, 3, 1, 1): weight-normalized 3x3 conv (w = g * v / ||v||) ---
    v3 = jax.random.normal(ks[1], (Cout, Cin, 3, 3), jnp.float32)
    g3 = jax.random.uniform(ks[2], (Cout,), jnp.float32, 0.5, 1.5)
    w3_oihw = g3[:, None, None, None] * v3 / jnp.sqrt(
        jnp.sum(v3 * v3, axis=(1, 2, 3), keepdims=True))
    b3 = 0.1 * jax.random.normal(ks[3], (Cout,), jnp.float32)

    # --- WNPReLU(Cout): per-channel PReLU slope ---
    alpha = 0.25 + 0.05 * jax.random.normal(ks[4], (Cout,), jnp.float32)

    # --- shortcut WNConv2d(Cin, Cout, 1) (present because Cin != Cout) ---
    v1 = jax.random.normal(ks[5], (Cout, Cin, 1, 1), jnp.float32)
    g1 = jnp.linspace(0.8, 1.2, Cout, dtype=jnp.float32)
    w1_oihw = g1[:, None, None, None] * v1 / jnp.sqrt(
        jnp.sum(v1 * v1, axis=(1, 2, 3), keepdims=True))
    b1 = 0.1 * jax.random.normal(ks[6], (Cout,), jnp.float32)

    # --- WNAdd(Cout, sqrt(1-rr), sqrt(rr)): per-channel scales ---
    wa = jnp.full((Cout,), (1.0 - residue_ratio) ** 0.5, jnp.float32)
    wb = jnp.full((Cout,), residue_ratio ** 0.5, jnp.float32)

    # kernel-layout parameters
    x_nhwc = jnp.transpose(x_nchw, (0, 2, 3, 1))
    w3_hwio = jnp.transpose(w3_oihw, (2, 3, 1, 0))        # (3, 3, Cin, Cout)
    w1_io = jnp.transpose(w1_oihw[:, :, 0, 0], (1, 0))    # (Cin, Cout)

    out_nhwc = mini_res_block(x_nhwc, w3_hwio, b3, alpha, w1_io, b1, wa, wb)
    out_nhwc = jax.block_until_ready(out_nhwc)
    out_nchw = jnp.transpose(out_nhwc, (0, 3, 1, 2))

    ref = ref_forward_nchw(x_nchw, w3_oihw, b3, alpha, w1_oihw, b1, wa, wb)
    max_err = float(jnp.max(jnp.abs(out_nchw - ref)))
    assert jnp.allclose(out_nchw, ref, atol=2e-3, rtol=2e-3), f"max_err={max_err}"
    print("KERNEL_OK")
</pallas_src>

<mosaic_0001>
module attributes {stable_mosaic.version = 11 : i64} {
  func.func @mini_res_block_kernel(%arg0: i32, %arg1: memref<16x64xf32, #tpu.memory_space<vmem>>, %arg2: memref<192x256xf32, #tpu.memory_space<vmem>>, %arg3: memref<8x128xf32, #tpu.memory_space<vmem>>, %arg4: memref<16x128xf32, #tpu.memory_space<vmem>>, %arg5: memref<16x192xf32, #tpu.memory_space<vmem>>) attributes {dimension_semantics = [#tpu.dimension_semantics<parallel>], iteration_bounds = array<i64: 2>, scalar_prefetch = 0 : i64, scratch_operands = 1 : i64, tpu.core_type = #tpu.core_type<tc>, window_params = [{transform_indices = @transform_0, window_bounds = array<i64: 16, 64>}, {pipeline_mode = #tpu.pipeline_mode<synchronous>, transform_indices = @transform_1, window_bounds = array<i64: 192, 256>}, {pipeline_mode = #tpu.pipeline_mode<synchronous>, transform_indices = @transform_2, window_bounds = array<i64: 8, 128>}, {transform_indices = @transform_3, window_bounds = array<i64: 16, 128>}]} {
    %c0 = arith.constant 0 : index
    %c0_0 = arith.constant 0 : index
    %0 = vector.load %arg1[%c0, %c0_0] : memref<16x64xf32, #tpu.memory_space<vmem>>, vector<16x64xf32>
    %1 = tpu.iota {dimensions = array<i32: 0>} : vector<16x64xi32>
    %c16_i32 = arith.constant 16 : i32
    %c0_i32 = arith.constant 0 : i32
    %2 = arith.cmpi eq, %c16_i32, %c0_i32 : i32
    %c1_i32 = arith.constant 1 : i32
    %3 = arith.select %2, %c1_i32, %c16_i32 : i32
    %4 = vector.broadcast %3 : i32 to vector<16x64xi32>
    %5 = arith.remsi %1, %4 : vector<16x64xi32>
    %c0_i32_1 = arith.constant 0 : i32
    %6 = vector.broadcast %c0_i32_1 : i32 to vector<16x64xi32>
    %7 = arith.cmpi ne, %5, %6 : vector<16x64xi32>
    %c0_i32_2 = arith.constant 0 : i32
    %8 = vector.broadcast %c0_i32_2 : i32 to vector<16x64xi32>
    %9 = arith.cmpi slt, %5, %8 : vector<16x64xi32>
    %c0_i32_3 = arith.constant 0 : i32
    %10 = arith.cmpi slt, %3, %c0_i32_3 : i32
    %11 = vector.broadcast %10 : i1 to vector<16x64xi1>
    %12 = vector.broadcast %11 : vector<16x64xi1> to vector<16x64xi1>
    %13 = arith.xori %9, %12 : vector<16x64xi1>
    %14 = arith.andi %13, %7 : vector<16x64xi1>
    %15 = vector.broadcast %3 : i32 to vector<16x64xi32>
    %16 = arith.addi %5, %15 : vector<16x64xi32>
    %17 = arith.select %14, %16, %5 : vector<16x64xi1>, vector<16x64xi32>
    %c0_i32_4 = arith.constant 0 : i32
    %18 = vector.broadcast %c0_i32_4 : i32 to vector<16x64xi32>
    %19 = arith.cmpi ne, %17, %18 : vector<16x64xi32>
    %c1_i32_5 = arith.constant 1 : i32
    %20 = tpu.dynamic_rotate %0 by %c1_i32_5 dim 0 : vector<16x64xf32>, i32 -> vector<16x64xf32>
    %cst = arith.constant 0.000000e+00 : f32
    %21 = vector.broadcast %cst : f32 to vector<16x64xf32>
    %22 = arith.select %19, %20, %21 : vector<16x64xi1>, vector<16x64xf32>
    %c15_i32 = arith.constant 15 : i32
    %23 = vector.broadcast %c15_i32 : i32 to vector<16x64xi32>
    %24 = arith.cmpi ne, %17, %23 : vector<16x64xi32>
    %c15_i32_6 = arith.constant 15 : i32
    %25 = tpu.dynamic_rotate %0 by %c15_i32_6 dim 0 : vector<16x64xf32>, i32 -> vector<16x64xf32>
    %cst_7 = arith.constant 0.000000e+00 : f32
    %26 = vector.broadcast %cst_7 : f32 to vector<16x64xf32>
    %27 = arith.select %24, %25, %26 : vector<16x64xi1>, vector<16x64xf32>
    %c0_8 = arith.constant 0 : index
    %c0_9 = arith.constant 0 : index
    %28 = vector.load %arg5[%c0_8, %c0_9] : memref<16x192xf32, #tpu.memory_space<vmem>>, vector<16x64xf32>
    tpu.vector_store %arg5[%c0_8, %c0_9], %22 {strides = array<i32>} : memref<16x192xf32, #tpu.memory_space<vmem>>, vector<16x64xf32>,
    %c0_10 = arith.constant 0 : index
    %c64 = arith.constant 64 : index
    %29 = vector.load %arg5[%c0_10, %c64] : memref<16x192xf32, #tpu.memory_space<vmem>>, vector<16x64xf32>
    tpu.vector_store %arg5[%c0_10, %c64], %0 {strides = array<i32>} : memref<16x192xf32, #tpu.memory_space<vmem>>, vector<16x64xf32>,
    %c0_11 = arith.constant 0 : index
    %c128 = arith.constant 128 : index
    %30 = vector.load %arg5[%c0_11, %c128] : memref<16x192xf32, #tpu.memory_space<vmem>>, vector<16x64xf32>
    tpu.vector_store %arg5[%c0_11, %c128], %27 {strides = array<i32>} : memref<16x192xf32, #tpu.memory_space<vmem>>, vector<16x64xf32>,
    %c0_12 = arith.constant 0 : index
    %c0_13 = arith.constant 0 : index
    %31 = vector.load %arg5[%c0_12, %c0_13] : memref<16x192xf32, #tpu.memory_space<vmem>>, vector<16x192xf32>
    %c0_14 = arith.constant 0 : index
    %c0_15 = arith.constant 0 : index
    %32 = vector.load %arg2[%c0_14, %c0_15] : memref<192x256xf32, #tpu.memory_space<vmem>>, vector<192x256xf32>
    %cst_16 = arith.constant dense<0.000000e+00> : vector<16x256xf32>
    %33 = tpu.matmul %31, %32, %cst_16 {dimension_numbers = #tpu.dot_dimension_numbers<[1], [0], [0], [1], [0, 0, 1, 1], [], []>} : vector<16x192xf32>, vector<192x256xf32>, vector<16x256xf32> -> vector<16x256xf32>
    %c0_17 = arith.constant 0 : index
    %c0_18 = arith.constant 0 : index
    %34 = vector.load %arg3[%c0_17, %c0_18] : memref<8x128xf32, #tpu.memory_space<vmem>>, vector<1x128xf32>
    %c1 = arith.constant 1 : index
    %c0_19 = arith.constant 0 : index
    %35 = vector.load %arg3[%c1, %c0_19] : memref<8x128xf32, #tpu.memory_space<vmem>>, vector<1x128xf32>
    %c2 = arith.constant 2 : index
    %c0_20 = arith.constant 0 : index
    %36 = vector.load %arg3[%c2, %c0_20] : memref<8x128xf32, #tpu.memory_space<vmem>>, vector<1x128xf32>
    %37 = vector.extract_strided_slice %33 {offsets = [0, 0], sizes = [16, 128], strides = [1, 1]} : vector<16x256xf32> to vector<16x128xf32>
    %38 = vector.broadcast %34 : vector<1x128xf32> to vector<16x128xf32>
    %39 = arith.addf %37, %38 : vector<16x128xf32>
    %cst_21 = arith.constant 0.000000e+00 : f32
    %40 = vector.broadcast %cst_21 : f32 to vector<16x128xf32>
    %41 = arith.cmpf ogt, %39, %40 : vector<16x128xf32>
    %42 = vector.broadcast %35 : vector<1x128xf32> to vector<16x128xf32>
    %43 = arith.mulf %42, %39 : vector<16x128xf32>
    %44 = arith.select %41, %39, %43 : vector<16x128xi1>, vector<16x128xf32>
    %45 = vector.extract_strided_slice %33 {offsets = [0, 128], sizes = [16, 128], strides = [1, 1]} : vector<16x256xf32> to vector<16x128xf32>
    %46 = vector.broadcast %36 : vector<1x128xf32> to vector<16x128xf32>
    %47 = arith.addf %45, %46 : vector<16x128xf32>
    %48 = arith.addf %47, %44 : vector<16x128xf32>
    %c0_22 = arith.constant 0 : index
    %c0_23 = arith.constant 0 : index
    %49 = vector.load %arg4[%c0_22, %c0_23] : memref<16x128xf32, #tpu.memory_space<vmem>>, vector<16x128xf32>
    tpu.vector_store %arg4[%c0_22, %c0_23], %48 {strides = array<i32>} : memref<16x128xf32, #tpu.memory_space<vmem>>, vector<16x128xf32>,
    return
  }
  func.func @transform_0(%arg0: i32) -> (i32, i32) {
    %c0_i32 = arith.constant 0 : i32
    %c0_i32_0 = arith.constant 0 : i32
    return %arg0, %c0_i32 : i32, i32
  }
  func.func @transform_1(%arg0: i32) -> (i32, i32) {
    %c0_i32 = arith.constant 0 : i32
    %c0_i32_0 = arith.constant 0 : i32
    %c0_i32_1 = arith.constant 0 : i32
    return %c0_i32, %c0_i32_0 : i32, i32
  }
  func.func @transform_2(%arg0: i32) -> (i32, i32) {
    %c0_i32 = arith.constant 0 : i32
    %c0_i32_0 = arith.constant 0 : i32
    %c0_i32_1 = arith.constant 0 : i32
    return %c0_i32, %c0_i32_0 : i32, i32
  }
  func.func @transform_3(%arg0: i32) -> (i32, i32) {
    %c0_i32 = arith.constant 0 : i32
    %c0_i32_0 = arith.constant 0 : i32
    return %arg0, %c0_i32 : i32, i32
  }
}

module attributes {stable_mosaic.version = 11 : i64} {
  func.func @mini_res_block_kernel(%arg0: i32, %arg1: memref<16x64xf32, #tpu.memory_space<vmem>>, %arg2: memref<192x256xf32, #tpu.memory_space<vmem>>, %arg3: memref<8x128xf32, #tpu.memory_space<vmem>>, %arg4: memref<16x128xf32, #tpu.memory_space<vmem>>, %arg5: memref<16x192xf32, #tpu.memory_space<vmem>>) attributes {dimension_semantics = [#tpu.dimension_semantics<parallel>], iteration_bounds = array<i64: 2>, scalar_prefetch = 0 : i64, scratch_operands = 1 : i64, tpu.core_type = #tpu.core_type<tc>, window_params = [{transform_indices = @transform_0, window_bounds = array<i64: 16, 64>}, {pipeline_mode = #tpu.pipeline_mode<synchronous>, transform_indices = @transform_1, window_bounds = array<i64: 192, 256>}, {pipeline_mode = #tpu.pipeline_mode<synchronous>, transform_indices = @transform_2, window_bounds = array<i64: 8, 128>}, {transform_indices = @transform_3, window_bounds = array<i64: 16, 128>}]} {
    %c0 = arith.constant 0 : index
    %c0_0 = arith.constant 0 : index
    %0 = vector.load %arg1[%c0, %c0_0] : memref<16x64xf32, #tpu.memory_space<vmem>>, vector<16x64xf32>
    %1 = tpu.iota {dimensions = array<i32: 0>} : vector<16x64xi32>
    %c16_i32 = arith.constant 16 : i32
    %c0_i32 = arith.constant 0 : i32
    %2 = arith.cmpi eq, %c16_i32, %c0_i32 : i32
    %c1_i32 = arith.constant 1 : i32
    %3 = arith.select %2, %c1_i32, %c16_i32 : i32
    %4 = vector.broadcast %3 : i32 to vector<16x64xi32>
    %5 = arith.remsi %1, %4 : vector<16x64xi32>
    %c0_i32_1 = arith.constant 0 : i32
    %6 = vector.broadcast %c0_i32_1 : i32 to vector<16x64xi32>
    %7 = arith.cmpi ne, %5, %6 : vector<16x64xi32>
    %c0_i32_2 = arith.constant 0 : i32
    %8 = vector.broadcast %c0_i32_2 : i32 to vector<16x64xi32>
    %9 = arith.cmpi slt, %5, %8 : vector<16x64xi32>
    %c0_i32_3 = arith.constant 0 : i32
    %10 = arith.cmpi slt, %3, %c0_i32_3 : i32
    %11 = vector.broadcast %10 : i1 to vector<16x64xi1>
    %12 = vector.broadcast %11 : vector<16x64xi1> to vector<16x64xi1>
    %13 = arith.xori %9, %12 : vector<16x64xi1>
    %14 = arith.andi %13, %7 : vector<16x64xi1>
    %15 = vector.broadcast %3 : i32 to vector<16x64xi32>
    %16 = arith.addi %5, %15 : vector<16x64xi32>
    %17 = arith.select %14, %16, %5 : vector<16x64xi1>, vector<16x64xi32>
    %c0_i32_4 = arith.constant 0 : i32
    %18 = vector.broadcast %c0_i32_4 : i32 to vector<16x64xi32>
    %19 = arith.cmpi ne, %17, %18 : vector<16x64xi32>
    %c1_i32_5 = arith.constant 1 : i32
    %20 = tpu.dynamic_rotate %0 by %c1_i32_5 dim 0 : vector<16x64xf32>, i32 -> vector<16x64xf32>
    %cst = arith.constant 0.000000e+00 : f32
    %21 = vector.broadcast %cst : f32 to vector<16x64xf32>
    %22 = arith.select %19, %20, %21 : vector<16x64xi1>, vector<16x64xf32>
    %c15_i32 = arith.constant 15 : i32
    %23 = vector.broadcast %c15_i32 : i32 to vector<16x64xi32>
    %24 = arith.cmpi ne, %17, %23 : vector<16x64xi32>
    %c15_i32_6 = arith.constant 15 : i32
    %25 = tpu.dynamic_rotate %0 by %c15_i32_6 dim 0 : vector<16x64xf32>, i32 -> vector<16x64xf32>
    %cst_7 = arith.constant 0.000000e+00 : f32
    %26 = vector.broadcast %cst_7 : f32 to vector<16x64xf32>
    %27 = arith.select %24, %25, %26 : vector<16x64xi1>, vector<16x64xf32>
    %c0_8 = arith.constant 0 : index
    %c0_9 = arith.constant 0 : index
    %28 = vector.load %arg5[%c0_8, %c0_9] : memref<16x192xf32, #tpu.memory_space<vmem>>, vector<16x64xf32>
    tpu.vector_store %arg5[%c0_8, %c0_9], %22 {strides = array<i32>} : memref<16x192xf32, #tpu.memory_space<vmem>>, vector<16x64xf32>,
    %c0_10 = arith.constant 0 : index
    %c64 = arith.constant 64 : index
    %29 = vector.load %arg5[%c0_10, %c64] : memref<16x192xf32, #tpu.memory_space<vmem>>, vector<16x64xf32>
    tpu.vector_store %arg5[%c0_10, %c64], %0 {strides = array<i32>} : memref<16x192xf32, #tpu.memory_space<vmem>>, vector<16x64xf32>,
    %c0_11 = arith.constant 0 : index
    %c128 = arith.constant 128 : index
    %30 = vector.load %arg5[%c0_11, %c128] : memref<16x192xf32, #tpu.memory_space<vmem>>, vector<16x64xf32>
    tpu.vector_store %arg5[%c0_11, %c128], %27 {strides = array<i32>} : memref<16x192xf32, #tpu.memory_space<vmem>>, vector<16x64xf32>,
    %c0_12 = arith.constant 0 : index
    %c0_13 = arith.constant 0 : index
    %31 = vector.load %arg5[%c0_12, %c0_13] : memref<16x192xf32, #tpu.memory_space<vmem>>, vector<16x192xf32>
    %c0_14 = arith.constant 0 : index
    %c0_15 = arith.constant 0 : index
    %32 = vector.load %arg2[%c0_14, %c0_15] : memref<192x256xf32, #tpu.memory_space<vmem>>, vector<192x256xf32>
    %cst_16 = arith.constant dense<0.000000e+00> : vector<16x256xf32>
    %33 = tpu.matmul %31, %32, %cst_16 {dimension_numbers = #tpu.dot_dimension_numbers<[1], [0], [0], [1], [0, 0, 1, 1], [], []>} : vector<16x192xf32>, vector<192x256xf32>, vector<16x256xf32> -> vector<16x256xf32>
    %c0_17 = arith.constant 0 : index
    %c0_18 = arith.constant 0 : index
    %34 = vector.load %arg3[%c0_17, %c0_18] : memref<8x128xf32, #tpu.memory_space<vmem>>, vector<1x128xf32>
    %c1 = arith.constant 1 : index
    %c0_19 = arith.constant 0 : index
    %35 = vector.load %arg3[%c1, %c0_19] : memref<8x128xf32, #tpu.memory_space<vmem>>, vector<1x128xf32>
    %c2 = arith.constant 2 : index
    %c0_20 = arith.constant 0 : index
    %36 = vector.load %arg3[%c2, %c0_20] : memref<8x128xf32, #tpu.memory_space<vmem>>, vector<1x128xf32>
    %37 = vector.extract_strided_slice %33 {offsets = [0, 0], sizes = [16, 128], strides = [1, 1]} : vector<16x256xf32> to vector<16x128xf32>
    %38 = vector.broadcast %34 : vector<1x128xf32> to vector<16x128xf32>
    %39 = arith.addf %37, %38 : vector<16x128xf32>
    %cst_21 = arith.constant 0.000000e+00 : f32
    %40 = vector.broadcast %cst_21 : f32 to vector<16x128xf32>
    %41 = arith.cmpf ogt, %39, %40 : vector<16x128xf32>
    %42 = vector.broadcast %35 : vector<1x128xf32> to vector<16x128xf32>
    %43 = arith.mulf %42, %39 : vector<16x128xf32>
    %44 = arith.select %41, %39, %43 : vector<16x128xi1>, vector<16x128xf32>
    %45 = vector.extract_strided_slice %33 {offsets = [0, 128], sizes = [16, 128], strides = [1, 1]} : vector<16x256xf32> to vector<16x128xf32>
    %46 = vector.broadcast %36 : vector<1x128xf32> to vector<16x128xf32>
    %47 = arith.addf %45, %46 : vector<16x128xf32>
    %48 = arith.addf %47, %44 : vector<16x128xf32>
    %c0_22 = arith.constant 0 : index
    %c0_23 = arith.constant 0 : index
    %49 = vector.load %arg4[%c0_22, %c0_23] : memref<16x128xf32, #tpu.memory_space<vmem>>, vector<16x128xf32>
    tpu.vector_store %arg4[%c0_22, %c0_23], %48 {strides = array<i32>} : memref<16x128xf32, #tpu.memory_space<vmem>>, vector<16x128xf32>,
    return
  }
  func.func @transform_0(%arg0: i32) -> (i32, i32) {
    %c0_i32 = arith.constant 0 : i32
    %c0_i32_0 = arith.constant 0 : i32
    return %arg0, %c0_i32 : i32, i32
  }
  func.func @transform_1(%arg0: i32) -> (i32, i32) {
    %c0_i32 = arith.constant 0 : i32
    %c0_i32_0 = arith.constant 0 : i32
    %c0_i32_1 = arith.constant 0 : i32
    return %c0_i32, %c0_i32_0 : i32, i32
  }
  func.func @transform_2(%arg0: i32) -> (i32, i32) {
    %c0_i32 = arith.constant 0 : i32
    %c0_i32_0 = arith.constant 0 : i32
    %c0_i32_1 = arith.constant 0 : i32
    return %c0_i32, %c0_i32_0 : i32, i32
  }
  func.func @transform_3(%arg0: i32) -> (i32, i32) {
    %c0_i32 = arith.constant 0 : i32
    %c0_i32_0 = arith.constant 0 : i32
    return %arg0, %c0_i32 : i32, i32
  }
}

</mosaic_0001>

<llo_original>
// kernel: tpu_custom_call.1
$region0: #{tpu_custom_call.1}
  #allocation0 [shape = 'u32[]', space=smem, size = 0x4, offset = 0x4, fixed_abs, tag = 'smem constant byte address 0x4 - core index']
  #allocation1 [shape = 'u32[144,128]{1,0:T(1,128)}', space=vmem, size = 0x12000, scoped, tag = 'internal scratch']
  #allocation2 [shape = 'f32[16,192]{1,0:T(8,128)}', space=vmem, size = 0x4000, scoped, tag = 'scratch operand']
  %s0 = inlined_call_operand.hbm [shape: f32[32,64], index: 0, kind: input, shape index: {}]
  %s1 = inlined_call_operand.hbm [shape: f32[192,256], index: 1, kind: input, shape index: {}]
  %s2 = inlined_call_operand.hbm [shape: f32[8,128], index: 2, kind: input, shape index: {}]
  %s3 = inlined_call_operand.hbm [shape: f32[32,128], index: 3, kind: output, shape index: {}]
  %s4 = sld [smem:[#allocation0]]
  $region57: #{tpu_custom_call.1} parent=0
    _
  %s6 = ssub.s32 1, %s4
  %s7 = scalar_select 0, %s6, %s4
  $region1: #{tpu_custom_call.1} parent=0
    #allocation3 [shape = 'u8[16384]{0}', space=vmem, size = 0x4000, scoped, tag = 'input window, operand 0']
    #allocation4 [shape = 's32[2]{0}', space=sflag, size = 0x8, scoped, tag = 'scoped memory for tpu_custom_call.1']
    #allocation5 [shape = 's32[2]{0}', space=sflag, size = 0x8, scoped, tag = 'scoped memory for tpu_custom_call.1']
    #allocation6 [shape = 'u8[196608]{0}', space=vmem, size = 0x30000, scoped, tag = 'input window, operand 1, single buffered']
    #allocation7 [shape = 's32[1]{0}', space=sflag, size = 0x4, scoped, tag = 'scoped memory for tpu_custom_call.1']
    #allocation8 [shape = 'u8[4096]{0}', space=vmem, size = 0x1000, scoped, tag = 'input window, operand 2, single buffered']
    #allocation9 [shape = 'u8[16384]{0}', space=vmem, size = 0x4000, scoped, tag = 'output window, operand 0']
    %8 = vsyncpa [#allocation4], 0
    %s9 = scalar_lea.sflag [#allocation4], 1
    %10 = vsyncpa %s9, 0
    %11 = vsyncpa [#allocation7], 0
    %12 = vsyncpa [#allocation5], 0
    %s13 = scalar_lea.sflag [#allocation5], 1
    %14 = vsyncpa %s13, 0
    loop: start=0, step=1, limit=4
    $region2: #{tpu_custom_call.1} parent=1 // loop_pre_header
      _
    $region3: #{tpu_custom_call.1} parent=1 // loop_header
      %s16 = sphi 0, %s20
      %p17 = scmp.ge.s32.totalorder %s16, 4
      %s26 = sphi 0, %s28
      %s29 = sphi 0, %s26
      %s30 = sphi 0, %s29
      %s46 = sphi 0, %s30
      %s50 = sphi 0, %s50
      %s52 = sphi 0, %s50
      %s53 = sphi 0, %s52
      %s67 = sphi 0, %s53
      %s71 = sphi 0, %s71
      %s73 = sphi 0, %s71
      %s74 = sphi 0, %s73
      %s88 = sphi 0, %s74
      %s94 = sphi 0, %s96
      %s97 = sphi 0, %s94
      %s98 = sphi 0, %s97
      %s114 = sphi 0, %s98
    $region4: #{tpu_custom_call.1} parent=1 // loop_header_branch
      %19 = sbr.rel (%p17) target = $region8
    $region5: #{tpu_custom_call.1} parent=1 // loop_body
      %s21 = ssub.s32 %s16, 1
      %s22 = ssub.s32 %s16, 2
      %s23 = sadd.s32 %s16, 1
      %s24 = ssub.s32 %s16, %s23
      %p25 = scmp.eq.s32.totalorder %s24, 0
      %s27 = sadd.s32 %s26, 1
      %s28 = scalar_select %p25, %s26, %s27
      %p31 = pneg %p25
      %p32 = scmp.eq.s32.totalorder %s16, 1
      %p33 = por %p31, %p32
      %p34 = scmp.ne.s32.totalorder %s26, %s29
      %p35 = scmp.eq.s32.totalorder %s16, 0
      %p36 = por %p34, %p35
      %p37 = scmp.ne.s32.totalorder %s26, %s29
      %p38 = scmp.eq.s32.totalorder %s21, 1
      %p39 = por %p37, %p38
      %p40 = scmp.ne.s32.totalorder %s29, %s30
      %p41 = scmp.eq.s32.totalorder %s21, 0
      %p42 = por %p40, %p41
      %p43 = scmp.ne.s32.totalorder %s29, %s30
      %p44 = scmp.eq.s32.totalorder %s22, 1
      %p45 = por %p43, %p44
      %p47 = scmp.ne.s32.totalorder %s30, %s46
      %p48 = scmp.eq.s32.totalorder %s22, 0
      %p49 = por %p47, %p48
      %s51 = sadd.s32 %s50, 1
      %p54 = scmp.eq.s32.totalorder %s16, 1
      %p55 = scmp.ne.s32.totalorder %s50, %s52
      %p56 = scmp.eq.s32.totalorder %s16, 0
      %p57 = por %p55, %p56
      %p58 = scmp.ne.s32.totalorder %s50, %s52
      %p59 = scmp.eq.s32.totalorder %s21, 1
      %p60 = por %p58, %p59
      %p61 = scmp.ne.s32.totalorder %s52, %s53
      %p62 = scmp.eq.s32.totalorder %s21, 0
      %p63 = por %p61, %p62
      %p64 = scmp.ne.s32.totalorder %s52, %s53
      %p65 = scmp.eq.s32.totalorder %s22, 1
      %p66 = por %p64, %p65
      %p68 = scmp.ne.s32.totalorder %s53, %s67
      %p69 = scmp.eq.s32.totalorder %s22, 0
      %p70 = por %p68, %p69
      %s72 = sadd.s32 %s71, 1
      %p75 = scmp.eq.s32.totalorder %s16, 1
      %p76 = scmp.ne.s32.totalorder %s71, %s73
      %p77 = scmp.eq.s32.totalorder %s16, 0
      %p78 = por %p76, %p77
      %p79 = scmp.ne.s32.totalorder %s71, %s73
      %p80 = scmp.eq.s32.totalorder %s21, 1
      %p81 = por %p79, %p80
      %p82 = scmp.ne.s32.totalorder %s73, %s74
      %p83 = scmp.eq.s32.totalorder %s21, 0
      %p84 = por %p82, %p83
      %p85 = scmp.ne.s32.totalorder %s73, %s74
      %p86 = scmp.eq.s32.totalorder %s22, 1
      %p87 = por %p85, %p86
      %p89 = scmp.ne.s32.totalorder %s74, %s88
      %p90 = scmp.eq.s32.totalorder %s22, 0
      %p91 = por %p89, %p90
      %s92 = ssub.s32 %s16, %s23
      %p93 = scmp.eq.s32.totalorder %s92, 0
      %s95 = sadd.s32 %s94, 1
      %s96 = scalar_select %p93, %s94, %s95
      %p99 = pneg %p93
      %p100 = scmp.eq.s32.totalorder %s16, 1
      %p101 = por %p99, %p100
      %p102 = scmp.ne.s32.totalorder %s94, %s97
      %p103 = scmp.eq.s32.totalorder %s16, 0
      %p104 = por %p102, %p103
      %p105 = scmp.ne.s32.totalorder %s94, %s97
      %p106 = scmp.eq.s32.totalorder %s21, 1
      %p107 = por %p105, %p106
      %p108 = scmp.ne.s32.totalorder %s97, %s98
      %p109 = scmp.eq.s32.totalorder %s21, 0
      %p110 = por %p108, %p109
      %p111 = scmp.ne.s32.totalorder %s97, %s98
      %p112 = scmp.eq.s32.totalorder %s22, 1
      %p113 = por %p111, %p112
      %p115 = scmp.ne.s32.totalorder %s98, %s114
      %p116 = scmp.eq.s32.totalorder %s22, 0
      %p117 = por %p115, %p116
      %p118 = scmp.le.s32.totalorder 1, %s16
      %p119 = scmp.lt.s32.totalorder %s16, 3
      %p120 = pnand %p118, %p119
      %p121 = pneg %p120
      // Predicated region
      $region9: #{tpu_custom_call.1} parent=5 // pred_check
        _
      $region10: #{tpu_custom_call.1} parent=5 // pred_check_branch
        %123 = sbr.rel (%p120) target = $region12
      $region11: #{tpu_custom_call.1} parent=5 // pred_region
        %s124 = ssub.s32 %s16, 1
        // Predicated region
        $region13: #{tpu_custom_call.1} parent=11 // pred_check
          %p125 = pneg %p63
        $region14: #{tpu_custom_call.1} parent=11 // pred_check_branch
          %127 = sbr.rel (%p125) target = $region16
        $region15: #{tpu_custom_call.1} parent=11 // pred_region
          %s129 = ssub.s32 6144, 6144
          %130 = vsyncadd [#allocation7], %s129
          %s131 = sshll.u32 [#allocation6], 4
          %s132 = int_to_ptr.vmem [resolvable:$true] %s131
          %137 = dma.hbm_to_vmem [thread:$0]  %s1, 6144, %s132, [#allocation7], 256, 256, 16
        $region16: #{tpu_custom_call.1} parent=11 // pred_fallthru
          _
        // Predicated region
        $region17: #{tpu_custom_call.1} parent=11 // pred_check
          %p138 = pneg %p84
        $region18: #{tpu_custom_call.1} parent=11 // pred_check_branch
          %140 = sbr.rel (%p138) target = $region20
        $region19: #{tpu_custom_call.1} parent=11 // pred_region
          %s142 = ssub.s32 128, 128
          %143 = vsyncadd [#allocation7], %s142
          %s145 = sshll.u32 [#allocation8], 4
          %s146 = int_to_ptr.vmem [resolvable:$true] %s145
          %148 = dma.hbm_to_vmem [thread:$0]  %s2, 128, %s146, [#allocation7]
        $region20: #{tpu_custom_call.1} parent=11 // pred_fallthru
          _
      $region12: #{tpu_custom_call.1} parent=5 // pred_fallthru
        _
      %p149 = scmp.lt.s32.totalorder %s16, 2
      // Predicated region
      $region21: #{tpu_custom_call.1} parent=5 // pred_check
        %p150 = pneg %p149
      $region22: #{tpu_custom_call.1} parent=5 // pred_check_branch
        %152 = sbr.rel (%p150) target = $region24
      $region23: #{tpu_custom_call.1} parent=5 // pred_region
        // Predicated region
        $region25: #{tpu_custom_call.1} parent=23 // pred_check
          %p153 = pneg %p36
        $region26: #{tpu_custom_call.1} parent=23 // pred_check_branch
          %155 = sbr.rel (%p153) target = $region28
        $region27: #{tpu_custom_call.1} parent=23 // pred_region
          %s156 = sand.u32 %s26, 1
          %s157 = scalar_lea.sflag [#allocation4], %s156
          %s158 = sand.u32 %s26, 1
          %s159 = smul.addr %s158, 16
          %s160 = scalar_lea.vmem [#allocation3], %s159
          %s161 = smul.u32 2, %s16
          %s163 = ssub.s32 256, 256
          %164 = vsyncadd %s157, %s163
          %s165 = smul.addr %s161, 128
          %s166 = scalar_lea.hbm %s0, %s165
          %s167 = sshll.u32 %s160, 4
          %s168 = int_to_ptr.vmem [resolvable:$true] %s167
          %173 = dma.hbm_to_vmem [thread:$0]  %s166, 256, %s168, %s157, 128, 128, 8
        $region28: #{tpu_custom_call.1} parent=23 // pred_fallthru
          _
      $region24: #{tpu_custom_call.1} parent=5 // pred_fallthru
        _
      %p174 = scmp.le.s32.totalorder 1, %s16
      %p175 = scmp.lt.s32.totalorder %s16, 3
      %p176 = pnand %p174, %p175
      %p177 = pneg %p176
      // Predicated region
      $region29: #{tpu_custom_call.1} parent=5 // pred_check
        _
      $region30: #{tpu_custom_call.1} parent=5 // pred_check_branch
        %179 = sbr.rel (%p176) target = $region32
      $region31: #{tpu_custom_call.1} parent=5 // pred_region
        %s180 = ssub.s32 %s16, 1
        %s181 = sand.u32 %s29, 1
        %s182 = scalar_lea.sflag [#allocation4], %s181
        %s183 = sand.u32 %s29, 1
        %s184 = smul.addr %s183, 16
        %s185 = scalar_lea.vmem [#allocation3], %s184
        // Predicated region
        $region33: #{tpu_custom_call.1} parent=31 // pred_check
          %p186 = pneg %p42
        $region34: #{tpu_custom_call.1} parent=31 // pred_check_branch
          %188 = sbr.rel (%p186) target = $region36
        $region35: #{tpu_custom_call.1} parent=31 // pred_region
          %189 = dma.done %s182, 256
        $region36: #{tpu_custom_call.1} parent=31 // pred_fallthru
          _
        // Predicated region
        $region37: #{tpu_custom_call.1} parent=31 // pred_check
          %p190 = pneg %p63
        $region38: #{tpu_custom_call.1} parent=31 // pred_check_branch
          %192 = sbr.rel (%p190) target = $region40
        $region39: #{tpu_custom_call.1} parent=31 // pred_region
          %193 = dma.done [#allocation7], 6144
        $region40: #{tpu_custom_call.1} parent=31 // pred_fallthru
          _
        // Predicated region
        $region41: #{tpu_custom_call.1} parent=31 // pred_check
          %p194 = pneg %p84
        $region42: #{tpu_custom_call.1} parent=31 // pred_check_branch
          %196 = sbr.rel (%p194) target = $region44
        $region43: #{tpu_custom_call.1} parent=31 // pred_region
          %197 = dma.done [#allocation7], 128
        $region44: #{tpu_custom_call.1} parent=31 // pred_fallthru
          _
        %s198 = sand.u32 %s29, 1
        %s199 = scalar_lea.sflag [#allocation4], %s198
        %s200 = sand.u32 %s29, 1
        %s201 = smul.addr %s200, 16
        %s202 = scalar_lea.vmem [#allocation3], %s201
        %p203 = pneg %p42
        %p204 = pneg %p39
        %p205 = pneg %p63
        %p206 = pneg %p60
        %p207 = pneg %p84
        %p208 = pneg %p81
        %p209 = pneg %p110
        %p210 = pneg %p107
        %s211 = sand.u32 %s97, 1
        %s212 = scalar_lea.sflag [#allocation5], %s211
        %s213 = sand.u32 %s97, 1
        %s214 = smul.addr %s213, 16
        %s215 = scalar_lea.vmem [#allocation9], %s214
        %s216 = smul.u32 2, %s21
        %s217 = smul.u32 2, %s21
        %v218 = vld [vmem:[%s185] sm:$0xff]
        %v219 = vld [vmem:[%s185 + $0x8] sm:$0xff]
        %v220 = vlaneseq
        %v221 = vshrl.u32 %v220, 7
        %v222 = vadd.s32 %v221, 8
        %vm223 = vcmp.lt.s32.totalorder %v221, 0
        %v224 = vsub.s32 0, %v221
        %v225 = vsel %vm223, %v224, %v221
        %v226 = vshrl.u32 %v225, 4
        %v227 = vand.u32 %v225, 15
        %v228 = vsub.s32 0, %v227
        %v229 = vsel %vm223, %v228, %v227
        %vm230 = vcmp.lt.s32.totalorder %v222, 0
        %v231 = vsub.s32 0, %v222
        %v232 = vsel %vm230, %v231, %v222
        %v233 = vshrl.u32 %v232, 4
        %v234 = vand.u32 %v232, 15
        %v235 = vsub.s32 0, %v234
        %v236 = vsel %vm230, %v235, %v234
        %vm237 = vcmp.ne.s32.totalorder %v229, 0
        %vm238 = vcmp.ne.s32.totalorder %v236, 0
        %vm239 = vcmp.lt.s32.totalorder %v229, 0
        %vm240 = vcmp.lt.s32.totalorder %v236, 0
        %vm241 = vmand %vm239, %vm237
        %vm242 = vmand %vm240, %vm238
        %v243 = vadd.s32 %v229, 16
        %v244 = vadd.s32 %v236, 16
        %v245 = vsel %vm241, %v243, %v229
        %v246 = vsel %vm242, %v244, %v236
        %vm247 = vcmp.ne.s32.totalorder %v245, 0
        %vm248 = vcmp.ne.s32.totalorder %v246, 0
        %v249 = vrot.slane %v218, 7
        %v250 = vrot.slane %v219, 7
        %vm251 = vcmp.lt.s32.totalorder %v221, 1
        %v252 = vsel %vm251, %v249, %v250
        %v253 = vsel %vm251, %v250, %v249
        %v254 = vsel %vm247, %v253, 0.0
        %v255 = vsel %vm248, %v252, 0.0
        %vm256 = vcmp.ne.s32.totalorder %v245, 15
        %vm257 = vcmp.ne.s32.totalorder %v246, 15
        %v258 = vrot.slane %v218, 1
        %v259 = vrot.slane %v219, 1
        %vm260 = vcmp.lt.s32.totalorder %v221, 7
        %v261 = vsel %vm260, %v258, %v259
        %v262 = vsel %vm260, %v259, %v258
        %v263 = vsel %vm256, %v261, 0.0
        %v264 = vsel %vm257, %v262, 0.0
        %vm265 = vcmask 523264
        %266 = vst.msk [vmem:[#allocation2] sm:$0xff] %vm265, %v254
        %267 = vst.msk [vmem:[#allocation2 + $0x10] sm:$0xff] %vm265, %v255
        %270 = vrot.lane.b32.xlu0 %v218, 64
        %v271 = vpop.permute.xlu0 %270
        %272 = vrot.lane.b32.xlu0 %v219, 64
        %v273 = vpop.permute.xlu0 %272
        %vm276 = vcmask 1048064
        %277 = vst.msk [vmem:[#allocation2] sm:$0xff] %vm276, %v271
        %278 = vst.msk [vmem:[#allocation2 + $0x10] sm:$0xff] %vm276, %v273
        %279 = vst.msk [vmem:[#allocation2 + $0x8] sm:$0xff] %vm265, %v263
        %280 = vst.msk [vmem:[#allocation2 + $0x18] sm:$0xff] %vm265, %v264
        %v281 = vld [vmem:[#allocation2] sm:$0xff]
        %v282 = vld [vmem:[#allocation2 + $0x8] sm:$0xff]
        %v283 = vld [vmem:[#allocation2 + $0x10] sm:$0xff]
        %v284 = vld [vmem:[#allocation2 + $0x18] sm:$0xff]
        %v285 = vld [vmem:[#allocation6] sm:$0xff]
        %v286 = vld [vmem:[#allocation6 + $0x8] sm:$0xff]
        %v287 = vld [vmem:[#allocation6 + $0x10] sm:$0xff]
        %v288 = vld [vmem:[#allocation6 + $0x18] sm:$0xff]
        %v289 = vld [vmem:[#allocation6 + $0x20] sm:$0xff]
        %v290 = vld [vmem:[#allocation6 + $0x28] sm:$0xff]
        %v291 = vld [vmem:[#allocation6 + $0x30] sm:$0xff]
        %v292 = vld [vmem:[#allocation6 + $0x38] sm:$0xff]
        %v293 = vld [vmem:[#allocation6 + $0x40] sm:$0xff]
        %v294 = vld [vmem:[#allocation6 + $0x48] sm:$0xff]
        %v295 = vld [vmem:[#allocation6 + $0x50] sm:$0xff]
        %v296 = vld [vmem:[#allocation6 + $0x58] sm:$0xff]
        %v297 = vld [vmem:[#allocation6 + $0x60] sm:$0xff]
        %v298 = vld [vmem:[#allocation6 + $0x68] sm:$0xff]
        %v299 = vld [vmem:[#allocation6 + $0x70] sm:$0xff]
        %v300 = vld [vmem:[#allocation6 + $0x78] sm:$0xff]
        %v301 = vld [vmem:[#allocation6 + $0x80] sm:$0xff]
        %v302 = vld [vmem:[#allocation6 + $0x88] sm:$0xff]
        %v303 = vld [vmem:[#allocation6 + $0x90] sm:$0xff]
        %v304 = vld [vmem:[#allocation6 + $0x98] sm:$0xff]
        %v305 = vld [vmem:[#allocation6 + $0xa0] sm:$0xff]
        %v306 = vld [vmem:[#allocation6 + $0xa8] sm:$0xff]
        %v307 = vld [vmem:[#allocation6 + $0xb0] sm:$0xff]
        %v308 = vld [vmem:[#allocation6 + $0xb8] sm:$0xff]
        %v309 = vld [vmem:[#allocation6 + $0xc0] sm:$0xff]
        %v310 = vld [vmem:[#allocation6 + $0xc8] sm:$0xff]
        %v311 = vld [vmem:[#allocation6 + $0xd0] sm:$0xff]
        %v312 = vld [vmem:[#allocation6 + $0xd8] sm:$0xff]
        %v313 = vld [vmem:[#allocation6 + $0xe0] sm:$0xff]
        %v314 = vld [vmem:[#allocation6 + $0xe8] sm:$0xff]
        %v315 = vld [vmem:[#allocation6 + $0xf0] sm:$0xff]
        %v316 = vld [vmem:[#allocation6 + $0xf8] sm:$0xff]
        %v317 = vld [vmem:[#allocation6 + $0x100] sm:$0xff]
        %v318 = vld [vmem:[#allocation6 + $0x108] sm:$0xff]
        %v319 = vld [vmem:[#allocation6 + $0x110] sm:$0xff]
        %v320 = vld [vmem:[#allocation6 + $0x118] sm:$0xff]
        %v321 = vld [vmem:[#allocation6 + $0x120] sm:$0xff]
        %v322 = vld [vmem:[#allocation6 + $0x128] sm:$0xff]
        %v323 = vld [vmem:[#allocation6 + $0x130] sm:$0xff]
        %v324 = vld [vmem:[#allocation6 + $0x138] sm:$0xff]
        %v325 = vld [vmem:[#allocation6 + $0x140] sm:$0xff]
        %v326 = vld [vmem:[#allocation6 + $0x148] sm:$0xff]
        %v327 = vld [vmem:[#allocation6 + $0x150] sm:$0xff]
        %v328 = vld [vmem:[#allocation6 + $0x158] sm:$0xff]
        %v329 = vld [vmem:[#allocation6 + $0x160] sm:$0xff]
        %v330 = vld [vmem:[#allocation6 + $0x168] sm:$0xff]
        %v331 = vld [vmem:[#allocation6 + $0x170] sm:$0xff]
        %v332 = vld [vmem:[#allocation6 + $0x178] sm:$0xff]
        %v334 = vsel %vm265, %v282, 0
        %v337 = vsel %vm265, %v284, 0
        %339 = vmatprep.subr.mxu0 %v316
        %340 = vmatpush1.msra.mxu0 %v315
        %341 = vmatprep.subr.mxu0 %v314
        %342 = vmatpush1.msra.mxu0 %v313
        %343 = vmatprep.subr.mxu0 %v312
        %344 = vmatpush1.msra.mxu0 %v311
        %345 = vmatprep.subr.mxu0 %v310
        %346 = vmatpush1.msra.mxu0 %v309
        %347 = vmatprep.subr.mxu0 %v308
        %348 = vmatpush1.msra.mxu0 %v307
        %349 = vmatprep.subr.mxu0 %v306
        %350 = vmatpush1.msra.mxu0 %v305
        %351 = vmatprep.subr.mxu0 %v304
        %352 = vmatpush1.msra.mxu0 %v303
        %353 = vmatprep.subr.mxu0 %v302
        %354 = vmatpush1.msra.mxu0 %v301
        %355 = vmatprep.subr.mxu0 %v300
        %356 = vmatpush1.msra.mxu0 %v299
        %357 = vmatprep.subr.mxu0 %v298
        %358 = vmatpush1.msra.mxu0 %v297
        %359 = vmatprep.subr.mxu0 %v296
        %360 = vmatpush1.msra.mxu0 %v295
        %361 = vmatprep.subr.mxu0 %v294
        %362 = vmatpush1.msra.mxu0 %v293
        %363 = vmatprep.subr.mxu0 %v292
        %364 = vmatpush1.msra.mxu0 %v291
        %365 = vmatprep.subr.mxu0 %v290
        %366 = vmatpush1.msra.mxu0 %v289
        %367 = vmatprep.subr.mxu0 %v288
        %368 = vmatpush1.msra.mxu0 %v287
        %369 = vmatprep.subr.mxu0 %v286
        %370 = vmatpush1.msra.mxu0 %v285
        %371 = vmatprep.subr.mxu0 0.0
        %372 = vmatpush2.msra.mxu0 0.0
        %373 = vmatprep.subr.mxu0 0.0
        %374 = vmatpush2.msra.mxu0 0.0
        %375 = vmatprep.subr.mxu0 0.0
        %376 = vmatpush2.msra.mxu0 0.0
        %377 = vmatprep.subr.mxu0 0.0
        %378 = vmatpush2.msra.mxu0 0.0
        %379 = vmatprep.subr.mxu0 0.0
        %380 = vmatpush2.msra.mxu0 0.0
        %381 = vmatprep.subr.mxu0 0.0
        %382 = vmatpush2.msra.mxu0 0.0
        %383 = vmatprep.subr.mxu0 0.0
        %384 = vmatpush2.msra.mxu0 0.0
        %385 = vmatprep.subr.mxu0 0.0
        %386 = vmatpush2.msra.mxu0 0.0
        %387 = vmatprep.subr.mxu0 %v332
        %388 = vmatpush2.msra.mxu0 %v331
        %389 = vmatprep.subr.mxu0 %v330
        %390 = vmatpush2.msra.mxu0 %v329
        %391 = vmatprep.subr.mxu0 %v328
        %392 = vmatpush2.msra.mxu0 %v327
        %393 = vmatprep.subr.mxu0 %v326
        %394 = vmatpush2.msra.mxu0 %v325
        %395 = vmatprep.subr.mxu0 %v324
        %396 = vmatpush2.msra.mxu0 %v323
        %397 = vmatprep.subr.mxu0 %v322
        %398 = vmatpush2.msra.mxu0 %v321
        %399 = vmatprep.subr.mxu0 %v320
        %400 = vmatpush2.msra.mxu0 %v319
        %401 = vmatprep.subr.mxu0 %v318
        %402 = vmatpush2.msra.mxu0 %v317
        %403 = vmatprep.mubr.f32.mxu0 %v334
        %404 = vmatmul.mubr.f32.gmra.mxu0 %v281
        %v405 = vpop.f32.mrf.mxu0
        %v406 = vadd.f32 0.0, %v405
        %v407 = vpop.f32.mrf.mxu0
        %v408 = vadd.f32 0.0, %v407
        %409 = vmatprep.mubr.f32.mxu0 %v337
        %410 = vmatmul.mubr.f32.gmra.mxu0 %v283
        %v411 = vpop.f32.mrf.mxu0
        %v412 = vadd.f32 0.0, %v411
        %v413 = vpop.f32.mrf.mxu0
        %v414 = vadd.f32 0.0, %v413
        %415 = vdwg.mxu0
        %v416 = vld [vmem:[#allocation8] sm:$0x1]
        %v417 = vld [vmem:[#allocation8 + $0x1] sm:$0x1]
        %v418 = vld [vmem:[#allocation8 + $0x2] sm:$0x1]
        %v419 = vlaneseq
        %v420 = vshrl.u32 %v419, 7
        %v421 = vsub.s32 0, %v420
        %v422 = vrot.slane %v416, %v421
        %v423 = vadd.f32 %v406, %v422
        %v424 = vadd.f32 %v412, %v422
        %vm425 = vcmp.gt.f32.partialorder %v423, 0.0
        %vm426 = vcmp.gt.f32.partialorder %v424, 0.0
        %v427 = vlaneseq
        %v428 = vshrl.u32 %v427, 7
        %v429 = vsub.s32 0, %v428
        %v430 = vrot.slane %v417, %v429
        %v431 = vmul.f32 %v430, %v423
        %v432 = vmul.f32 %v430, %v424
        %v433 = vsel %vm425, %v423, %v431
        %v434 = vsel %vm426, %v424, %v432
        %v435 = vlaneseq
        %v436 = vshrl.u32 %v435, 7
        %v437 = vsub.s32 0, %v436
        %v438 = vrot.slane %v418, %v437
        %v439 = vadd.f32 %v408, %v438
        %v440 = vadd.f32 %v414, %v438
        %v441 = vadd.f32 %v439, %v433
        %v442 = vadd.f32 %v440, %v434
        %443 = vst [vmem:[%s215] sm:$0xff] %v441
        %444 = vst [vmem:[%s215 + $0x8] sm:$0xff] %v442
        %s445 = sand.u32 %s97, 1
        %s446 = scalar_lea.sflag [#allocation5], %s445
        %s447 = sand.u32 %s97, 1
        %s448 = smul.addr %s447, 16
        %s449 = scalar_lea.vmem [#allocation9], %s448
        // Predicated region
        $region45: #{tpu_custom_call.1} parent=31 // pred_check
          %p450 = pneg %p107
        $region46: #{tpu_custom_call.1} parent=31 // pred_check_branch
          %452 = sbr.rel (%p450) target = $region48
        $region47: #{tpu_custom_call.1} parent=31 // pred_region
          %s453 = smul.u32 2, %s21
          %s455 = ssub.s32 256, 256
          %456 = vsyncadd %s446, %s455
          %s457 = smul.addr %s453, 128
          %s458 = scalar_lea.hbm %s3, %s457
          %s459 = sshll.u32 %s449, 4
          %s460 = int_to_ptr.vmem [resolvable:$true] %s459
          %465 = dma.vmem_to_hbm [thread:$0]  %s460, 256, %s458, %s446, 128, 128, 8
        $region48: #{tpu_custom_call.1} parent=31 // pred_fallthru
          _
      $region32: #{tpu_custom_call.1} parent=5 // pred_fallthru
        _
      %p466 = scmp.le.s32.totalorder 2, %s16
      // Predicated region
      $region49: #{tpu_custom_call.1} parent=5 // pred_check
        %p467 = pneg %p466
      $region50: #{tpu_custom_call.1} parent=5 // pred_check_branch
        %469 = sbr.rel (%p467) target = $region52
      $region51: #{tpu_custom_call.1} parent=5 // pred_region
        %s470 = ssub.s32 %s16, 2
        // Predicated region
        $region53: #{tpu_custom_call.1} parent=51 // pred_check
          %p471 = pneg %p113
        $region54: #{tpu_custom_call.1} parent=51 // pred_check_branch
          %473 = sbr.rel (%p471) target = $region56
        $region55: #{tpu_custom_call.1} parent=51 // pred_region
          %s474 = sand.u32 %s98, 1
          %s475 = scalar_lea.sflag [#allocation5], %s474
          %s476 = sand.u32 %s98, 1
          %s477 = smul.addr %s476, 16
          %s478 = scalar_lea.vmem [#allocation9], %s477
          %479 = dma.done %s475, 256
        $region56: #{tpu_custom_call.1} parent=51 // pred_fallthru
          _
      $region52: #{tpu_custom_call.1} parent=5 // pred_fallthru
        _
    $region6: #{tpu_custom_call.1} parent=1 // loop_footer
      %s20 = sadd.s32 1, %s16
    $region7: #{tpu_custom_call.1} parent=1 // loop_footer_branch
      %15 = sbr.rel target = $region3
    $region8: #{tpu_custom_call.1} parent=1 // loop_exit
      _
    %480 = vsyncpa [#allocation4], 1
    %s481 = scalar_lea.sflag [#allocation4], 1
    %482 = vsyncpa %s481, 1
    %483 = vsyncpa [#allocation7], 1
    %484 = vsyncpa [#allocation5], 1
    %s485 = scalar_lea.sflag [#allocation5], 1
    %486 = vsyncpa %s485, 1

// kernel: tpu_custom_call.1
$region0: #{tpu_custom_call.1}
  #allocation0 [shape = 'u32[]', space=smem, size = 0x4, offset = 0x4, fixed_abs, tag = 'smem constant byte address 0x4 - core index']
  #allocation1 [shape = 'u32[144,128]{1,0:T(1,128)}', space=vmem, size = 0x12000, scoped, tag = 'internal scratch']
  #allocation2 [shape = 'f32[16,192]{1,0:T(8,128)}', space=vmem, size = 0x4000, scoped, tag = 'scratch operand']
  %s0 = inlined_call_operand.hbm [shape: f32[32,64], index: 0, kind: input, shape index: {}]
  %s1 = inlined_call_operand.hbm [shape: f32[192,256], index: 1, kind: input, shape index: {}]
  %s2 = inlined_call_operand.hbm [shape: f32[8,128], index: 2, kind: input, shape index: {}]
  %s3 = inlined_call_operand.hbm [shape: f32[32,128], index: 3, kind: output, shape index: {}]
  %s4 = sld [smem:[#allocation0]]
  $region57: #{tpu_custom_call.1} parent=0
    _
  %s6 = ssub.s32 1, %s4
  %s7 = scalar_select 0, %s6, %s4
  $region1: #{tpu_custom_call.1} parent=0
    #allocation3 [shape = 'u8[16384]{0}', space=vmem, size = 0x4000, scoped, tag = 'input window, operand 0']
    #allocation4 [shape = 's32[2]{0}', space=sflag, size = 0x8, scoped, tag = 'scoped memory for tpu_custom_call.1']
    #allocation5 [shape = 's32[2]{0}', space=sflag, size = 0x8, scoped, tag = 'scoped memory for tpu_custom_call.1']
    #allocation6 [shape = 'u8[196608]{0}', space=vmem, size = 0x30000, scoped, tag = 'input window, operand 1, single buffered']
    #allocation7 [shape = 's32[1]{0}', space=sflag, size = 0x4, scoped, tag = 'scoped memory for tpu_custom_call.1']
    #allocation8 [shape = 'u8[4096]{0}', space=vmem, size = 0x1000, scoped, tag = 'input window, operand 2, single buffered']
    #allocation9 [shape = 'u8[16384]{0}', space=vmem, size = 0x4000, scoped, tag = 'output window, operand 0']
    %8 = vsyncpa [#allocation4], 0
    %s9 = scalar_lea.sflag [#allocation4], 1
    %10 = vsyncpa %s9, 0
    %11 = vsyncpa [#allocation7], 0
    %12 = vsyncpa [#allocation5], 0
    %s13 = scalar_lea.sflag [#allocation5], 1
    %14 = vsyncpa %s13, 0
    loop: start=0, step=1, limit=4
    $region2: #{tpu_custom_call.1} parent=1 // loop_pre_header
      _
    $region3: #{tpu_custom_call.1} parent=1 // loop_header
      %s16 = sphi 0, %s20
      %p17 = scmp.ge.s32.totalorder %s16, 4
      %s26 = sphi 0, %s28
      %s29 = sphi 0, %s26
      %s30 = sphi 0, %s29
      %s46 = sphi 0, %s30
      %s50 = sphi 0, %s50
      %s52 = sphi 0, %s50
      %s53 = sphi 0, %s52
      %s67 = sphi 0, %s53
      %s71 = sphi 0, %s71
      %s73 = sphi 0, %s71
      %s74 = sphi 0, %s73
      %s88 = sphi 0, %s74
      %s94 = sphi 0, %s96
      %s97 = sphi 0, %s94
      %s98 = sphi 0, %s97
      %s114 = sphi 0, %s98
    $region4: #{tpu_custom_call.1} parent=1 // loop_header_branch
      %19 = sbr.rel (%p17) target = $region8
    $region5: #{tpu_custom_call.1} parent=1 // loop_body
      %s21 = ssub.s32 %s16, 1
      %s22 = ssub.s32 %s16, 2
      %s23 = sadd.s32 %s16, 1
      %s24 = ssub.s32 %s16, %s23
      %p25 = scmp.eq.s32.totalorder %s24, 0
      %s27 = sadd.s32 %s26, 1
      %s28 = scalar_select %p25, %s26, %s27
      %p31 = pneg %p25
      %p32 = scmp.eq.s32.totalorder %s16, 1
      %p33 = por %p31, %p32
      %p34 = scmp.ne.s32.totalorder %s26, %s29
      %p35 = scmp.eq.s32.totalorder %s16, 0
      %p36 = por %p34, %p35
      %p37 = scmp.ne.s32.totalorder %s26, %s29
      %p38 = scmp.eq.s32.totalorder %s21, 1
      %p39 = por %p37, %p38
      %p40 = scmp.ne.s32.totalorder %s29, %s30
      %p41 = scmp.eq.s32.totalorder %s21, 0
      %p42 = por %p40, %p41
      %p43 = scmp.ne.s32.totalorder %s29, %s30
      %p44 = scmp.eq.s32.totalorder %s22, 1
      %p45 = por %p43, %p44
      %p47 = scmp.ne.s32.totalorder %s30, %s46
      %p48 = scmp.eq.s32.totalorder %s22, 0
      %p49 = por %p47, %p48
      %s51 = sadd.s32 %s50, 1
      %p54 = scmp.eq.s32.totalorder %s16, 1
      %p55 = scmp.ne.s32.totalorder %s50, %s52
      %p56 = scmp.eq.s32.totalorder %s16, 0
      %p57 = por %p55, %p56
      %p58 = scmp.ne.s32.totalorder %s50, %s52
      %p59 = scmp.eq.s32.totalorder %s21, 1
      %p60 = por %p58, %p59
      %p61 = scmp.ne.s32.totalorder %s52, %s53
      %p62 = scmp.eq.s32.totalorder %s21, 0
      %p63 = por %p61, %p62
      %p64 = scmp.ne.s32.totalorder %s52, %s53
      %p65 = scmp.eq.s32.totalorder %s22, 1
      %p66 = por %p64, %p65
      %p68 = scmp.ne.s32.totalorder %s53, %s67
      %p69 = scmp.eq.s32.totalorder %s22, 0
      %p70 = por %p68, %p69
      %s72 = sadd.s32 %s71, 1
      %p75 = scmp.eq.s32.totalorder %s16, 1
      %p76 = scmp.ne.s32.totalorder %s71, %s73
      %p77 = scmp.eq.s32.totalorder %s16, 0
      %p78 = por %p76, %p77
      %p79 = scmp.ne.s32.totalorder %s71, %s73
      %p80 = scmp.eq.s32.totalorder %s21, 1
      %p81 = por %p79, %p80
      %p82 = scmp.ne.s32.totalorder %s73, %s74
      %p83 = scmp.eq.s32.totalorder %s21, 0
      %p84 = por %p82, %p83
      %p85 = scmp.ne.s32.totalorder %s73, %s74
      %p86 = scmp.eq.s32.totalorder %s22, 1
      %p87 = por %p85, %p86
      %p89 = scmp.ne.s32.totalorder %s74, %s88
      %p90 = scmp.eq.s32.totalorder %s22, 0
      %p91 = por %p89, %p90
      %s92 = ssub.s32 %s16, %s23
      %p93 = scmp.eq.s32.totalorder %s92, 0
      %s95 = sadd.s32 %s94, 1
      %s96 = scalar_select %p93, %s94, %s95
      %p99 = pneg %p93
      %p100 = scmp.eq.s32.totalorder %s16, 1
      %p101 = por %p99, %p100
      %p102 = scmp.ne.s32.totalorder %s94, %s97
      %p103 = scmp.eq.s32.totalorder %s16, 0
      %p104 = por %p102, %p103
      %p105 = scmp.ne.s32.totalorder %s94, %s97
      %p106 = scmp.eq.s32.totalorder %s21, 1
      %p107 = por %p105, %p106
      %p108 = scmp.ne.s32.totalorder %s97, %s98
      %p109 = scmp.eq.s32.totalorder %s21, 0
      %p110 = por %p108, %p109
      %p111 = scmp.ne.s32.totalorder %s97, %s98
      %p112 = scmp.eq.s32.totalorder %s22, 1
      %p113 = por %p111, %p112
      %p115 = scmp.ne.s32.totalorder %s98, %s114
      %p116 = scmp.eq.s32.totalorder %s22, 0
      %p117 = por %p115, %p116
      %p118 = scmp.le.s32.totalorder 1, %s16
      %p119 = scmp.lt.s32.totalorder %s16, 3
      %p120 = pnand %p118, %p119
      %p121 = pneg %p120
      // Predicated region
      $region9: #{tpu_custom_call.1} parent=5 // pred_check
        _
      $region10: #{tpu_custom_call.1} parent=5 // pred_check_branch
        %123 = sbr.rel (%p120) target = $region12
      $region11: #{tpu_custom_call.1} parent=5 // pred_region
        %s124 = ssub.s32 %s16, 1
        // Predicated region
        $region13: #{tpu_custom_call.1} parent=11 // pred_check
          %p125 = pneg %p63
        $region14: #{tpu_custom_call.1} parent=11 // pred_check_branch
          %127 = sbr.rel (%p125) target = $region16
        $region15: #{tpu_custom_call.1} parent=11 // pred_region
          %s129 = ssub.s32 6144, 6144
          %130 = vsyncadd [#allocation7], %s129
          %s131 = sshll.u32 [#allocation6], 4
          %s132 = int_to_ptr.vmem [resolvable:$true] %s131
          %137 = dma.hbm_to_vmem [thread:$0]  %s1, 6144, %s132, [#allocation7], 256, 256, 16
        $region16: #{tpu_custom_call.1} parent=11 // pred_fallthru
          _
        // Predicated region
        $region17: #{tpu_custom_call.1} parent=11 // pred_check
          %p138 = pneg %p84
        $region18: #{tpu_custom_call.1} parent=11 // pred_check_branch
          %140 = sbr.rel (%p138) target = $region20
        $region19: #{tpu_custom_call.1} parent=11 // pred_region
          %s142 = ssub.s32 128, 128
          %143 = vsyncadd [#allocation7], %s142
          %s145 = sshll.u32 [#allocation8], 4
          %s146 = int_to_ptr.vmem [resolvable:$true] %s145
          %148 = dma.hbm_to_vmem [thread:$0]  %s2, 128, %s146, [#allocation7]
        $region20: #{tpu_custom_call.1} parent=11 // pred_fallthru
          _
      $region12: #{tpu_custom_call.1} parent=5 // pred_fallthru
        _
      %p149 = scmp.lt.s32.totalorder %s16, 2
      // Predicated region
      $region21: #{tpu_custom_call.1} parent=5 // pred_check
        %p150 = pneg %p149
      $region22: #{tpu_custom_call.1} parent=5 // pred_check_branch
        %152 = sbr.rel (%p150) target = $region24
      $region23: #{tpu_custom_call.1} parent=5 // pred_region
        // Predicated region
        $region25: #{tpu_custom_call.1} parent=23 // pred_check
          %p153 = pneg %p36
        $region26: #{tpu_custom_call.1} parent=23 // pred_check_branch
          %155 = sbr.rel (%p153) target = $region28
        $region27: #{tpu_custom_call.1} parent=23 // pred_region
          %s156 = sand.u32 %s26, 1
          %s157 = scalar_lea.sflag [#allocation4], %s156
          %s158 = sand.u32 %s26, 1
          %s159 = smul.addr %s158, 16
          %s160 = scalar_lea.vmem [#allocation3], %s159
          %s161 = smul.u32 2, %s16
          %s163 = ssub.s32 256, 256
          %164 = vsyncadd %s157, %s163
          %s165 = smul.addr %s161, 128
          %s166 = scalar_lea.hbm %s0, %s165
          %s167 = sshll.u32 %s160, 4
          %s168 = int_to_ptr.vmem [resolvable:$true] %s167
          %173 = dma.hbm_to_vmem [thread:$0]  %s166, 256, %s168, %s157, 128, 128, 8
        $region28: #{tpu_custom_call.1} parent=23 // pred_fallthru
          _
      $region24: #{tpu_custom_call.1} parent=5 // pred_fallthru
        _
      %p174 = scmp.le.s32.totalorder 1, %s16
      %p175 = scmp.lt.s32.totalorder %s16, 3
      %p176 = pnand %p174, %p175
      %p177 = pneg %p176
      // Predicated region
      $region29: #{tpu_custom_call.1} parent=5 // pred_check
        _
      $region30: #{tpu_custom_call.1} parent=5 // pred_check_branch
        %179 = sbr.rel (%p176) target = $region32
      $region31: #{tpu_custom_call.1} parent=5 // pred_region
        %s180 = ssub.s32 %s16, 1
        %s181 = sand.u32 %s29, 1
        %s182 = scalar_lea.sflag [#allocation4], %s181
        %s183 = sand.u32 %s29, 1
        %s184 = smul.addr %s183, 16
        %s185 = scalar_lea.vmem [#allocation3], %s184
        // Predicated region
        $region33: #{tpu_custom_call.1} parent=31 // pred_check
          %p186 = pneg %p42
        $region34: #{tpu_custom_call.1} parent=31 // pred_check_branch
          %188 = sbr.rel (%p186) target = $region36
        $region35: #{tpu_custom_call.1} parent=31 // pred_region
          %189 = dma.done %s182, 256
        $region36: #{tpu_custom_call.1} parent=31 // pred_fallthru
          _
        // Predicated region
        $region37: #{tpu_custom_call.1} parent=31 // pred_check
          %p190 = pneg %p63
        $region38: #{tpu_custom_call.1} parent=31 // pred_check_branch
          %192 = sbr.rel (%p190) target = $region40
        $region39: #{tpu_custom_call.1} parent=31 // pred_region
          %193 = dma.done [#allocation7], 6144
        $region40: #{tpu_custom_call.1} parent=31 // pred_fallthru
          _
        // Predicated region
        $region41: #{tpu_custom_call.1} parent=31 // pred_check
          %p194 = pneg %p84
        $region42: #{tpu_custom_call.1} parent=31 // pred_check_branch
          %196 = sbr.rel (%p194) target = $region44
        $region43: #{tpu_custom_call.1} parent=31 // pred_region
          %197 = dma.done [#allocation7], 128
        $region44: #{tpu_custom_call.1} parent=31 // pred_fallthru
          _
        %s198 = sand.u32 %s29, 1
        %s199 = scalar_lea.sflag [#allocation4], %s198
        %s200 = sand.u32 %s29, 1
        %s201 = smul.addr %s200, 16
        %s202 = scalar_lea.vmem [#allocation3], %s201
        %p203 = pneg %p42
        %p204 = pneg %p39
        %p205 = pneg %p63
        %p206 = pneg %p60
        %p207 = pneg %p84
        %p208 = pneg %p81
        %p209 = pneg %p110
        %p210 = pneg %p107
        %s211 = sand.u32 %s97, 1
        %s212 = scalar_lea.sflag [#allocation5], %s211
        %s213 = sand.u32 %s97, 1
        %s214 = smul.addr %s213, 16
        %s215 = scalar_lea.vmem [#allocation9], %s214
        %s216 = smul.u32 2, %s21
        %s217 = smul.u32 2, %s21
        %v218 = vld [vmem:[%s185] sm:$0xff]
        %v219 = vld [vmem:[%s185 + $0x8] sm:$0xff]
        %v220 = vlaneseq
        %v221 = vshrl.u32 %v220, 7
        %v222 = vadd.s32 %v221, 8
        %vm223 = vcmp.lt.s32.totalorder %v221, 0
        %v224 = vsub.s32 0, %v221
        %v225 = vsel %vm223, %v224, %v221
        %v226 = vshrl.u32 %v225, 4
        %v227 = vand.u32 %v225, 15
        %v228 = vsub.s32 0, %v227
        %v229 = vsel %vm223, %v228, %v227
        %vm230 = vcmp.lt.s32.totalorder %v222, 0
        %v231 = vsub.s32 0, %v222
        %v232 = vsel %vm230, %v231, %v222
        %v233 = vshrl.u32 %v232, 4
        %v234 = vand.u32 %v232, 15
        %v235 = vsub.s32 0, %v234
        %v236 = vsel %vm230, %v235, %v234
        %vm237 = vcmp.ne.s32.totalorder %v229, 0
        %vm238 = vcmp.ne.s32.totalorder %v236, 0
        %vm239 = vcmp.lt.s32.totalorder %v229, 0
        %vm240 = vcmp.lt.s32.totalorder %v236, 0
        %vm241 = vmand %vm239, %vm237
        %vm242 = vmand %vm240, %vm238
        %v243 = vadd.s32 %v229, 16
        %v244 = vadd.s32 %v236, 16
        %v245 = vsel %vm241, %v243, %v229
        %v246 = vsel %vm242, %v244, %v236
        %vm247 = vcmp.ne.s32.totalorder %v245, 0
        %vm248 = vcmp.ne.s32.totalorder %v246, 0
        %v249 = vrot.slane %v218, 7
        %v250 = vrot.slane %v219, 7
        %vm251 = vcmp.lt.s32.totalorder %v221, 1
        %v252 = vsel %vm251, %v249, %v250
        %v253 = vsel %vm251, %v250, %v249
        %v254 = vsel %vm247, %v253, 0.0
        %v255 = vsel %vm248, %v252, 0.0
        %vm256 = vcmp.ne.s32.totalorder %v245, 15
        %vm257 = vcmp.ne.s32.totalorder %v246, 15
        %v258 = vrot.slane %v218, 1
        %v259 = vrot.slane %v219, 1
        %vm260 = vcmp.lt.s32.totalorder %v221, 7
        %v261 = vsel %vm260, %v258, %v259
        %v262 = vsel %vm260, %v259, %v258
        %v263 = vsel %vm256, %v261, 0.0
        %v264 = vsel %vm257, %v262, 0.0
        %vm265 = vcmask 523264
        %266 = vst.msk [vmem:[#allocation2] sm:$0xff] %vm265, %v254
        %267 = vst.msk [vmem:[#allocation2 + $0x10] sm:$0xff] %vm265, %v255
        %270 = vrot.lane.b32.xlu0 %v218, 64
        %v271 = vpop.permute.xlu0 %270
        %272 = vrot.lane.b32.xlu0 %v219, 64
        %v273 = vpop.permute.xlu0 %272
        %vm276 = vcmask 1048064
        %277 = vst.msk [vmem:[#allocation2] sm:$0xff] %vm276, %v271
        %278 = vst.msk [vmem:[#allocation2 + $0x10] sm:$0xff] %vm276, %v273
        %279 = vst.msk [vmem:[#allocation2 + $0x8] sm:$0xff] %vm265, %v263
        %280 = vst.msk [vmem:[#allocation2 + $0x18] sm:$0xff] %vm265, %v264
        %v281 = vld [vmem:[#allocation2] sm:$0xff]
        %v282 = vld [vmem:[#allocation2 + $0x8] sm:$0xff]
        %v283 = vld [vmem:[#allocation2 + $0x10] sm:$0xff]
        %v284 = vld [vmem:[#allocation2 + $0x18] sm:$0xff]
        %v285 = vld [vmem:[#allocation6] sm:$0xff]
        %v286 = vld [vmem:[#allocation6 + $0x8] sm:$0xff]
        %v287 = vld [vmem:[#allocation6 + $0x10] sm:$0xff]
        %v288 = vld [vmem:[#allocation6 + $0x18] sm:$0xff]
        %v289 = vld [vmem:[#allocation6 + $0x20] sm:$0xff]
        %v290 = vld [vmem:[#allocation6 + $0x28] sm:$0xff]
        %v291 = vld [vmem:[#allocation6 + $0x30] sm:$0xff]
        %v292 = vld [vmem:[#allocation6 + $0x38] sm:$0xff]
        %v293 = vld [vmem:[#allocation6 + $0x40] sm:$0xff]
        %v294 = vld [vmem:[#allocation6 + $0x48] sm:$0xff]
        %v295 = vld [vmem:[#allocation6 + $0x50] sm:$0xff]
        %v296 = vld [vmem:[#allocation6 + $0x58] sm:$0xff]
        %v297 = vld [vmem:[#allocation6 + $0x60] sm:$0xff]
        %v298 = vld [vmem:[#allocation6 + $0x68] sm:$0xff]
        %v299 = vld [vmem:[#allocation6 + $0x70] sm:$0xff]
        %v300 = vld [vmem:[#allocation6 + $0x78] sm:$0xff]
        %v301 = vld [vmem:[#allocation6 + $0x80] sm:$0xff]
        %v302 = vld [vmem:[#allocation6 + $0x88] sm:$0xff]
        %v303 = vld [vmem:[#allocation6 + $0x90] sm:$0xff]
        %v304 = vld [vmem:[#allocation6 + $0x98] sm:$0xff]
        %v305 = vld [vmem:[#allocation6 + $0xa0] sm:$0xff]
        %v306 = vld [vmem:[#allocation6 + $0xa8] sm:$0xff]
        %v307 = vld [vmem:[#allocation6 + $0xb0] sm:$0xff]
        %v308 = vld [vmem:[#allocation6 + $0xb8] sm:$0xff]
        %v309 = vld [vmem:[#allocation6 + $0xc0] sm:$0xff]
        %v310 = vld [vmem:[#allocation6 + $0xc8] sm:$0xff]
        %v311 = vld [vmem:[#allocation6 + $0xd0] sm:$0xff]
        %v312 = vld [vmem:[#allocation6 + $0xd8] sm:$0xff]
        %v313 = vld [vmem:[#allocation6 + $0xe0] sm:$0xff]
        %v314 = vld [vmem:[#allocation6 + $0xe8] sm:$0xff]
        %v315 = vld [vmem:[#allocation6 + $0xf0] sm:$0xff]
        %v316 = vld [vmem:[#allocation6 + $0xf8] sm:$0xff]
        %v317 = vld [vmem:[#allocation6 + $0x100] sm:$0xff]
        %v318 = vld [vmem:[#allocation6 + $0x108] sm:$0xff]
        %v319 = vld [vmem:[#allocation6 + $0x110] sm:$0xff]
        %v320 = vld [vmem:[#allocation6 + $0x118] sm:$0xff]
        %v321 = vld [vmem:[#allocation6 + $0x120] sm:$0xff]
        %v322 = vld [vmem:[#allocation6 + $0x128] sm:$0xff]
        %v323 = vld [vmem:[#allocation6 + $0x130] sm:$0xff]
        %v324 = vld [vmem:[#allocation6 + $0x138] sm:$0xff]
        %v325 = vld [vmem:[#allocation6 + $0x140] sm:$0xff]
        %v326 = vld [vmem:[#allocation6 + $0x148] sm:$0xff]
        %v327 = vld [vmem:[#allocation6 + $0x150] sm:$0xff]
        %v328 = vld [vmem:[#allocation6 + $0x158] sm:$0xff]
        %v329 = vld [vmem:[#allocation6 + $0x160] sm:$0xff]
        %v330 = vld [vmem:[#allocation6 + $0x168] sm:$0xff]
        %v331 = vld [vmem:[#allocation6 + $0x170] sm:$0xff]
        %v332 = vld [vmem:[#allocation6 + $0x178] sm:$0xff]
        %v334 = vsel %vm265, %v282, 0
        %v337 = vsel %vm265, %v284, 0
        %339 = vmatprep.subr.mxu0 %v316
        %340 = vmatpush1.msra.mxu0 %v315
        %341 = vmatprep.subr.mxu0 %v314
        %342 = vmatpush1.msra.mxu0 %v313
        %343 = vmatprep.subr.mxu0 %v312
        %344 = vmatpush1.msra.mxu0 %v311
        %345 = vmatprep.subr.mxu0 %v310
        %346 = vmatpush1.msra.mxu0 %v309
        %347 = vmatprep.subr.mxu0 %v308
        %348 = vmatpush1.msra.mxu0 %v307
        %349 = vmatprep.subr.mxu0 %v306
        %350 = vmatpush1.msra.mxu0 %v305
        %351 = vmatprep.subr.mxu0 %v304
        %352 = vmatpush1.msra.mxu0 %v303
        %353 = vmatprep.subr.mxu0 %v302
        %354 = vmatpush1.msra.mxu0 %v301
        %355 = vmatprep.subr.mxu0 %v300
        %356 = vmatpush1.msra.mxu0 %v299
        %357 = vmatprep.subr.mxu0 %v298
        %358 = vmatpush1.msra.mxu0 %v297
        %359 = vmatprep.subr.mxu0 %v296
        %360 = vmatpush1.msra.mxu0 %v295
        %361 = vmatprep.subr.mxu0 %v294
        %362 = vmatpush1.msra.mxu0 %v293
        %363 = vmatprep.subr.mxu0 %v292
        %364 = vmatpush1.msra.mxu0 %v291
        %365 = vmatprep.subr.mxu0 %v290
        %366 = vmatpush1.msra.mxu0 %v289
        %367 = vmatprep.subr.mxu0 %v288
        %368 = vmatpush1.msra.mxu0 %v287
        %369 = vmatprep.subr.mxu0 %v286
        %370 = vmatpush1.msra.mxu0 %v285
        %371 = vmatprep.subr.mxu0 0.0
        %372 = vmatpush2.msra.mxu0 0.0
        %373 = vmatprep.subr.mxu0 0.0
        %374 = vmatpush2.msra.mxu0 0.0
        %375 = vmatprep.subr.mxu0 0.0
        %376 = vmatpush2.msra.mxu0 0.0
        %377 = vmatprep.subr.mxu0 0.0
        %378 = vmatpush2.msra.mxu0 0.0
        %379 = vmatprep.subr.mxu0 0.0
        %380 = vmatpush2.msra.mxu0 0.0
        %381 = vmatprep.subr.mxu0 0.0
        %382 = vmatpush2.msra.mxu0 0.0
        %383 = vmatprep.subr.mxu0 0.0
        %384 = vmatpush2.msra.mxu0 0.0
        %385 = vmatprep.subr.mxu0 0.0
        %386 = vmatpush2.msra.mxu0 0.0
        %387 = vmatprep.subr.mxu0 %v332
        %388 = vmatpush2.msra.mxu0 %v331
        %389 = vmatprep.subr.mxu0 %v330
        %390 = vmatpush2.msra.mxu0 %v329
        %391 = vmatprep.subr.mxu0 %v328
        %392 = vmatpush2.msra.mxu0 %v327
        %393 = vmatprep.subr.mxu0 %v326
        %394 = vmatpush2.msra.mxu0 %v325
        %395 = vmatprep.subr.mxu0 %v324
        %396 = vmatpush2.msra.mxu0 %v323
        %397 = vmatprep.subr.mxu0 %v322
        %398 = vmatpush2.msra.mxu0 %v321
        %399 = vmatprep.subr.mxu0 %v320
        %400 = vmatpush2.msra.mxu0 %v319
        %401 = vmatprep.subr.mxu0 %v318
        %402 = vmatpush2.msra.mxu0 %v317
        %403 = vmatprep.mubr.f32.mxu0 %v334
        %404 = vmatmul.mubr.f32.gmra.mxu0 %v281
        %v405 = vpop.f32.mrf.mxu0
        %v406 = vadd.f32 0.0, %v405
        %v407 = vpop.f32.mrf.mxu0
        %v408 = vadd.f32 0.0, %v407
        %409 = vmatprep.mubr.f32.mxu0 %v337
        %410 = vmatmul.mubr.f32.gmra.mxu0 %v283
        %v411 = vpop.f32.mrf.mxu0
        %v412 = vadd.f32 0.0, %v411
        %v413 = vpop.f32.mrf.mxu0
        %v414 = vadd.f32 0.0, %v413
        %415 = vdwg.mxu0
        %v416 = vld [vmem:[#allocation8] sm:$0x1]
        %v417 = vld [vmem:[#allocation8 + $0x1] sm:$0x1]
        %v418 = vld [vmem:[#allocation8 + $0x2] sm:$0x1]
        %v419 = vlaneseq
        %v420 = vshrl.u32 %v419, 7
        %v421 = vsub.s32 0, %v420
        %v422 = vrot.slane %v416, %v421
        %v423 = vadd.f32 %v406, %v422
        %v424 = vadd.f32 %v412, %v422
        %vm425 = vcmp.gt.f32.partialorder %v423, 0.0
        %vm426 = vcmp.gt.f32.partialorder %v424, 0.0
        %v427 = vlaneseq
        %v428 = vshrl.u32 %v427, 7
        %v429 = vsub.s32 0, %v428
        %v430 = vrot.slane %v417, %v429
        %v431 = vmul.f32 %v430, %v423
        %v432 = vmul.f32 %v430, %v424
        %v433 = vsel %vm425, %v423, %v431
        %v434 = vsel %vm426, %v424, %v432
        %v435 = vlaneseq
        %v436 = vshrl.u32 %v435, 7
        %v437 = vsub.s32 0, %v436
        %v438 = vrot.slane %v418, %v437
        %v439 = vadd.f32 %v408, %v438
        %v440 = vadd.f32 %v414, %v438
        %v441 = vadd.f32 %v439, %v433
        %v442 = vadd.f32 %v440, %v434
        %443 = vst [vmem:[%s215] sm:$0xff] %v441
        %444 = vst [vmem:[%s215 + $0x8] sm:$0xff] %v442
        %s445 = sand.u32 %s97, 1
        %s446 = scalar_lea.sflag [#allocation5], %s445
        %s447 = sand.u32 %s97, 1
        %s448 = smul.addr %s447, 16
        %s449 = scalar_lea.vmem [#allocation9], %s448
        // Predicated region
        $region45: #{tpu_custom_call.1} parent=31 // pred_check
          %p450 = pneg %p107
        $region46: #{tpu_custom_call.1} parent=31 // pred_check_branch
          %452 = sbr.rel (%p450) target = $region48
        $region47: #{tpu_custom_call.1} parent=31 // pred_region
          %s453 = smul.u32 2, %s21
          %s455 = ssub.s32 256, 256
          %456 = vsyncadd %s446, %s455
          %s457 = smul.addr %s453, 128
          %s458 = scalar_lea.hbm %s3, %s457
          %s459 = sshll.u32 %s449, 4
          %s460 = int_to_ptr.vmem [resolvable:$true] %s459
          %465 = dma.vmem_to_hbm [thread:$0]  %s460, 256, %s458, %s446, 128, 128, 8
        $region48: #{tpu_custom_call.1} parent=31 // pred_fallthru
          _
      $region32: #{tpu_custom_call.1} parent=5 // pred_fallthru
        _
      %p466 = scmp.le.s32.totalorder 2, %s16
      // Predicated region
      $region49: #{tpu_custom_call.1} parent=5 // pred_check
        %p467 = pneg %p466
      $region50: #{tpu_custom_call.1} parent=5 // pred_check_branch
        %469 = sbr.rel (%p467) target = $region52
      $region51: #{tpu_custom_call.1} parent=5 // pred_region
        %s470 = ssub.s32 %s16, 2
        // Predicated region
        $region53: #{tpu_custom_call.1} parent=51 // pred_check
          %p471 = pneg %p113
        $region54: #{tpu_custom_call.1} parent=51 // pred_check_branch
          %473 = sbr.rel (%p471) target = $region56
        $region55: #{tpu_custom_call.1} parent=51 // pred_region
          %s474 = sand.u32 %s98, 1
          %s475 = scalar_lea.sflag [#allocation5], %s474
          %s476 = sand.u32 %s98, 1
          %s477 = smul.addr %s476, 16
          %s478 = scalar_lea.vmem [#allocation9], %s477
          %479 = dma.done %s475, 256
        $region56: #{tpu_custom_call.1} parent=51 // pred_fallthru
          _
      $region52: #{tpu_custom_call.1} parent=5 // pred_fallthru
        _
    $region6: #{tpu_custom_call.1} parent=1 // loop_footer
      %s20 = sadd.s32 1, %s16
    $region7: #{tpu_custom_call.1} parent=1 // loop_footer_branch
      %15 = sbr.rel target = $region3
    $region8: #{tpu_custom_call.1} parent=1 // loop_exit
      _
    %480 = vsyncpa [#allocation4], 1
    %s481 = scalar_lea.sflag [#allocation4], 1
    %482 = vsyncpa %s481, 1
    %483 = vsyncpa [#allocation7], 1
    %484 = vsyncpa [#allocation5], 1
    %s485 = scalar_lea.sflag [#allocation5], 1
    %486 = vsyncpa %s485, 1

</llo_original>
